<compile_context>
chip_gen: v5e
topology: v5e:2x2
jax: 0.10.0
libtpu: 0.0.40
codegen_flags: <defaults>
</compile_context>

<pallas_src>
import math

import jax
import jax.numpy as jnp
from jax.experimental import pallas as pl
from jax.experimental.pallas import tpu as pltpu


def _round_up(x, m):
    return ((x + m - 1) // m) * m


# ----------------------------------------------------------------------------- GELU
# XLA's float32 erf rational approximation (only mul/add/div/clamp -> always lowers).
_ERF_ALPHA = (0.00022905065861350646, 0.0034082910107109506,
              0.050955695062380861, 0.18520832239976145, 1.128379143519084)
_ERF_BETA = (-1.1791602954361697e-07, 2.3547966471313185e-05,
             0.0010179625278914885, 0.014070470171167667,
             0.11098505178285362, 0.49746925110067538, 1.0)
_ERF_CLAMP = 3.832506856900711


def _erf_f32(x):
    x = jnp.clip(x, -_ERF_CLAMP, _ERF_CLAMP)
    x2 = x * x
    num = _ERF_ALPHA[0]
    for c in _ERF_ALPHA[1:]:
        num = num * x2 + c
    den = _ERF_BETA[0]
    for c in _ERF_BETA[1:]:
        den = den * x2 + c
    return (x * num) / den


def _gelu_exact(x):
    """Exact (erf-based) GELU, matching torch.nn.functional.gelu default."""
    return x * 0.5 * (1.0 + _erf_f32(x * 0.7071067811865476))


# --------------------------------------------------------------------------- kernels
def _ff_body(x_ref, w1x_ref, b1x_ref, w1g_ref, b1g_ref, w2_ref):
    # Cast x once per resident row tile (cheap VPU work hidden under the MXU).
    x = x_ref[...].astype(w1x_ref.dtype)
    hx = jnp.dot(x, w1x_ref[...], preferred_element_type=jnp.float32) + b1x_ref[...]
    hg = jnp.dot(x, w1g_ref[...], preferred_element_type=jnp.float32) + b1g_ref[...]
    act = hx * _gelu_exact(hg)                       # GEGLU
    return jnp.dot(act.astype(w2_ref.dtype), w2_ref[...],
                   preferred_element_type=jnp.float32)


def _ff_kernel_acc(x_ref, w1x_ref, b1x_ref, w1g_ref, b1g_ref, w2_ref, b2_ref,
                   o_ref, acc_ref):
    """Low-precision output: accumulate in a f32 VMEM scratch, cast at finalize."""
    n = pl.program_id(1)

    @pl.when(n == 0)
    def _init():
        acc_ref[...] = jnp.zeros_like(acc_ref)

    acc_ref[...] += _ff_body(x_ref, w1x_ref, b1x_ref, w1g_ref, b1g_ref, w2_ref)

    @pl.when(n == pl.num_programs(1) - 1)
    def _finalize():
        o_ref[...] = (acc_ref[...] + b2_ref[...]).astype(o_ref.dtype)


def _ff_kernel_f32out(x_ref, w1x_ref, b1x_ref, w1g_ref, b1g_ref, w2_ref, b2_ref,
                      o_ref):
    """float32 output: accumulate directly into the resident output tile (no scratch)."""
    n = pl.program_id(1)

    @pl.when(n == 0)
    def _init():
        o_ref[...] = jnp.zeros_like(o_ref)

    o_ref[...] += _ff_body(x_ref, w1x_ref, b1x_ref, w1g_ref, b1g_ref, w2_ref)

    @pl.when(n == pl.num_programs(1) - 1)
    def _finalize():
        o_ref[...] = o_ref[...] + b2_ref[...]


# -------------------------------------------------------------------------- tiling
def _select_tiles(M, dim_pad, hid_pad, x_bytes, w_bytes, out_bytes, needs_acc_scratch):
    try:
        vmem_cap = int(pltpu.get_tpu_info().vmem_capacity_bytes)
    except Exception:
        vmem_cap = 64 * 2**20          # v7x-sized worst case (safe everywhere)
    vmem_budget = int(vmem_cap * 0.80)  # headroom for Mosaic internal scratch

    # Hidden (reduction) tile: largest multiple of 128 dividing hid_pad, capped so
    # double-buffered weight tiles still fit on 64 MiB chips at large dim.
    tn_cap = 256 if (dim_pad >= 4096 and vmem_cap <= 64 * 2**20) else 512
    tn = 128
    for cand in range(tn_cap, 127, -128):
        if hid_pad % cand == 0:
            tn = cand
            break

    def vmem_est(tm_):
        est = 2 * tm_ * dim_pad * x_bytes                 # x row tile (double-buffered)
        est += 2 * (3 * dim_pad * tn) * w_bytes           # W1x/W1g/W2 tiles (double-buffered)
        est += 2 * (2 * tn + dim_pad) * 4                 # biases (f32)
        est += 2 * tm_ * dim_pad * out_bytes              # output tile
        if needs_acc_scratch:
            est += tm_ * dim_pad * 4                      # f32 accumulator
        est += 3 * tm_ * tn * 4                           # hx/hg/act f32 temporaries
        return est

    # Row tile: big enough to amortize weight re-streaming (roofline needs ~680
    # rows of reuse on v6e, ~320 on v7x, ~240 on v5e), bounded by VMEM budget.
    tm_target = 1024 if vmem_cap > 64 * 2**20 else 512
    tm = min(tm_target, _round_up(M, 8))
    while tm > 8 and vmem_est(tm) > vmem_budget:
        tm = max(8, _round_up(tm // 2, 8))

    # Keep the row-tile count even (when > 1) so both v7x TensorCores stay balanced.
    n_row = -(-M // tm)
    if n_row > 1 and n_row % 2 == 1:
        n_row += 1
        tm = max(8, _round_up(-(-M // n_row), 8))

    M_pad = _round_up(M, tm)
    return tm, tn, M_pad, vmem_budget, vmem_est(tm)


# ------------------------------------------------------------------------- wrappers
def prepare_feedforward_params(w1, b1, w2, b2, *, compute_dtype=jnp.bfloat16):
    """One-time parameter prep (hoisted out of the per-call hot path):
    split W1/b1 into GEGLU value/gate halves, pad dim/hidden to multiples of 128,
    cast weights to the MXU compute dtype. Biases stay f32 (epilogue precision)."""
    dim, two_hidden = w1.shape
    hidden = two_hidden // 2
    dim_pad = _round_up(dim, 128)
    hid_pad = _round_up(hidden, 128)

    w1x, w1g = w1[:, :hidden], w1[:, hidden:]
    b1x, b1g = b1[:hidden], b1[hidden:]

    def pad2(a, rows, cols):
        return jnp.pad(a, ((0, rows - a.shape[0]), (0, cols - a.shape[1])))

    return dict(
        dim=dim, hidden=hidden, dim_pad=dim_pad, hid_pad=hid_pad,
        compute_dtype=compute_dtype,
        w1x=pad2(w1x, dim_pad, hid_pad).astype(compute_dtype),
        w1g=pad2(w1g, dim_pad, hid_pad).astype(compute_dtype),
        w2=pad2(w2, hid_pad, dim_pad).astype(compute_dtype),
        b1x=pad2(b1x.reshape(1, hidden), 1, hid_pad).astype(jnp.float32),
        b1g=pad2(b1g.reshape(1, hidden), 1, hid_pad).astype(jnp.float32),
        b2=pad2(b2.reshape(1, dim), 1, dim_pad).astype(jnp.float32),
    )


def feedforward_pallas(x, params):
    """x: (batch, seq, dim) -> (batch, seq, dim) in x.dtype."""
    batch, seq, dim = x.shape
    assert dim == params["dim"]
    M = batch * seq
    dim_pad, hid_pad = params["dim_pad"], params["hid_pad"]
    compute_dtype = params["compute_dtype"]
    out_dtype = x.dtype
    out_is_f32 = jnp.dtype(out_dtype) == jnp.dtype(jnp.float32)

    x_bytes = jnp.dtype(x.dtype).itemsize
    w_bytes = jnp.dtype(compute_dtype).itemsize
    out_bytes = jnp.dtype(out_dtype).itemsize

    tm, tn, M_pad, vmem_budget, vmem_est = _select_tiles(
        M, dim_pad, hid_pad, x_bytes, w_bytes, out_bytes,
        needs_acc_scratch=not out_is_f32)

    # x keeps its dtype (kernel casts per resident row tile); pad only when needed.
    x2d = x.reshape(M, dim)
    if M_pad != M or dim_pad != dim:
        x2d = jnp.pad(x2d, ((0, M_pad - M), (0, dim_pad - dim)))

    grid = (M_pad // tm, hid_pad // tn)
    n_row = grid[0]

    # Advisory cost estimate; weight bytes reflect re-streaming per row tile.
    flops = 6 * M_pad * dim_pad * hid_pad
    transcendentals = M_pad * hid_pad
    bytes_accessed = (
        M_pad * dim_pad * x_bytes
        + n_row * 3 * dim_pad * hid_pad * w_bytes
        + (2 * hid_pad + dim_pad) * 4
        + M_pad * dim_pad * out_bytes
    )
    vmem_limit = int(min(vmem_budget, max(int(1.5 * vmem_est), 32 * 2**20)))

    in_specs = [
        pl.BlockSpec((tm, dim_pad), lambda i, n: (i, 0)),   # x row tile (resident over n)
        pl.BlockSpec((dim_pad, tn), lambda i, n: (0, n)),   # W1 value half tile
        pl.BlockSpec((1, tn), lambda i, n: (0, n)),         # b1 value half tile
        pl.BlockSpec((dim_pad, tn), lambda i, n: (0, n)),   # W1 gate half tile
        pl.BlockSpec((1, tn), lambda i, n: (0, n)),         # b1 gate half tile
        pl.BlockSpec((tn, dim_pad), lambda i, n: (n, 0)),   # W2 tile
        pl.BlockSpec((1, dim_pad), lambda i, n: (0, 0)),    # b2 (resident)
    ]
    out_spec = pl.BlockSpec((tm, dim_pad), lambda i, n: (i, 0))

    if out_is_f32:
        kernel = _ff_kernel_f32out
        scratch_shapes = []
    else:
        kernel = _ff_kernel_acc
        scratch_shapes = [pltpu.VMEM((tm, dim_pad), jnp.float32)]

    out2d = pl.pallas_call(
        kernel,
        out_shape=jax.ShapeDtypeStruct((M_pad, dim_pad), out_dtype),
        grid_spec=pltpu.PrefetchScalarGridSpec(
            num_scalar_prefetch=0,
            grid=grid,
            in_specs=in_specs,
            out_specs=out_spec,
            scratch_shapes=scratch_shapes,
        ),
        compiler_params=pltpu.CompilerParams(
            dimension_semantics=("parallel", "arbitrary"),
            vmem_limit_bytes=vmem_limit,
        ),
        cost_estimate=pl.CostEstimate(
            flops=flops,
            transcendentals=transcendentals,
            bytes_accessed=bytes_accessed,
        ),
    )(x2d, params["w1x"], params["b1x"], params["w1g"], params["b1g"],
      params["w2"], params["b2"])

    return out2d[:M, :dim].reshape(batch, seq, dim)


# ------------------------------------------------------------------ init / reference
def init_feedforward_params(key, dim, mult=4, dtype=jnp.float32):
    """PyTorch nn.Linear default init (uniform +-1/sqrt(fan_in)); weights stored
    pre-transposed: W1 (dim, dim*mult*2), W2 (dim*mult, dim)."""
    hidden = dim * mult
    k1, k2, k3, k4 = jax.random.split(key, 4)
    bound1 = 1.0 / math.sqrt(dim)
    bound2 = 1.0 / math.sqrt(hidden)
    w1 = jax.random.uniform(k1, (dim, 2 * hidden), dtype, -bound1, bound1)
    b1 = jax.random.uniform(k2, (2 * hidden,), dtype, -bound1, bound1)
    w2 = jax.random.uniform(k3, (hidden, dim), dtype, -bound2, bound2)
    b2 = jax.random.uniform(k4, (dim,), dtype, -bound2, bound2)
    return w1, b1, w2, b2


def feedforward_reference(x, w1, b1, w2, b2):
    """Pure-JAX (f32) reference: Linear -> GEGLU (exact gelu) -> Linear."""
    h = x @ w1 + b1
    hidden = h.shape[-1] // 2
    act = h[..., :hidden] * jax.nn.gelu(h[..., hidden:], approximate=False)
    return act @ w2 + b2


if __name__ == "__main__":
    key = jax.random.PRNGKey(0)
    k_x, k_p = jax.random.split(key)

    batch, seq, dim, mult = 2, 8, 32, 4          # hidden = 128, 2*hidden = 256
    x = jax.random.normal(k_x, (batch, seq, dim), jnp.float32)
    w1, b1, w2, b2 = init_feedforward_params(k_p, dim, mult)

    ref = feedforward_reference(x, w1, b1, w2, b2)

    # One-time parameter prep (hoisted out of the hot path); bf16 MXU production path.
    params_bf16 = prepare_feedforward_params(w1, b1, w2, b2, compute_dtype=jnp.bfloat16)
    out_bf16 = jax.block_until_ready(feedforward_pallas(x, params_bf16))
    assert out_bf16.shape == (batch, seq, dim)
    assert jnp.allclose(out_bf16, ref, atol=5e-2, rtol=5e-2), "bf16 path mismatch vs reference"

    # bf16 activations/output path (exercises the f32-scratch accumulator kernel).
    out_lp = jax.block_until_ready(feedforward_pallas(x.astype(jnp.bfloat16), params_bf16))
    assert out_lp.dtype == jnp.bfloat16
    assert jnp.allclose(out_lp.astype(jnp.float32), ref, atol=8e-2, rtol=8e-2), \
        "bf16-output path mismatch vs reference"

    # Full f32 path for a tight numerical check of the fused accumulation.
    params_f32 = prepare_feedforward_params(w1, b1, w2, b2, compute_dtype=jnp.float32)
    out_f32 = jax.block_until_ready(feedforward_pallas(x, params_f32))
    assert jnp.allclose(out_f32, ref, atol=1e-4, rtol=1e-4), "f32 path mismatch vs reference"

    print("KERNEL_OK")
</pallas_src>

<mosaic_0001>
module attributes {stable_mosaic.version = 11 : i64} {
  func.func @_ff_kernel_f32out(%arg0: i32, %arg1: i32, %arg2: memref<16x128xf32, #tpu.memory_space<vmem>>, %arg3: memref<128x128xbf16, #tpu.memory_space<vmem>>, %arg4: memref<1x128xf32, #tpu.memory_space<vmem>>, %arg5: memref<128x128xbf16, #tpu.memory_space<vmem>>, %arg6: memref<1x128xf32, #tpu.memory_space<vmem>>, %arg7: memref<128x128xbf16, #tpu.memory_space<vmem>>, %arg8: memref<1x128xf32, #tpu.memory_space<vmem>>, %arg9: memref<16x128xf32, #tpu.memory_space<vmem>>) attributes {dimension_semantics = [#tpu.dimension_semantics<parallel>, #tpu.dimension_semantics<arbitrary>], iteration_bounds = array<i64: 1, 1>, scalar_prefetch = 0 : i64, scratch_operands = 0 : i64, tpu.core_type = #tpu.core_type<tc>, window_params = [{transform_indices = @transform_0, window_bounds = array<i64: 16, 128>}, {transform_indices = @transform_1, window_bounds = array<i64: 128, 128>}, {transform_indices = @transform_2, window_bounds = array<i64: 1, 128>}, {transform_indices = @transform_3, window_bounds = array<i64: 128, 128>}, {transform_indices = @transform_4, window_bounds = array<i64: 1, 128>}, {transform_indices = @transform_5, window_bounds = array<i64: 128, 128>}, {pipeline_mode = #tpu.pipeline_mode<synchronous>, transform_indices = @transform_6, window_bounds = array<i64: 1, 128>}, {transform_indices = @transform_7, window_bounds = array<i64: 16, 128>}]} {
    %c0_i32 = arith.constant 0 : i32
    %0 = arith.cmpi eq, %arg1, %c0_i32 : i32
    %1 = arith.extui %0 : i1 to i32
    %c0_i32_0 = arith.constant 0 : i32
    %2 = arith.cmpi ne, %1, %c0_i32_0 : i32
    scf.if %2 {
      %cst_37 = arith.constant 0.000000e+00 : f32
      %71 = vector.broadcast %cst_37 : f32 to vector<16x128xf32>
      %c0_38 = arith.constant 0 : index
      %c0_39 = arith.constant 0 : index
      %72 = vector.load %arg9[%c0_38, %c0_39] : memref<16x128xf32, #tpu.memory_space<vmem>>, vector<16x128xf32>
      tpu.vector_store %arg9[%c0_38, %c0_39], %71 {strides = array<i32>} : memref<16x128xf32, #tpu.memory_space<vmem>>, vector<16x128xf32>,
    } else {
    }
    %c0 = arith.constant 0 : index
    %c0_1 = arith.constant 0 : index
    %3 = vector.load %arg9[%c0, %c0_1] : memref<16x128xf32, #tpu.memory_space<vmem>>, vector<16x128xf32>
    %c0_2 = arith.constant 0 : index
    %c0_3 = arith.constant 0 : index
    %4 = vector.load %arg2[%c0_2, %c0_3] : memref<16x128xf32, #tpu.memory_space<vmem>>, vector<16x128xf32>
    %5 = arith.truncf %4 : vector<16x128xf32> to vector<16x128xbf16>
    %c0_4 = arith.constant 0 : index
    %c0_5 = arith.constant 0 : index
    %6 = vector.load %arg3[%c0_4, %c0_5] : memref<128x128xbf16, #tpu.memory_space<vmem>>, vector<128x128xbf16>
    %cst = arith.constant dense<0.000000e+00> : vector<16x128xf32>
    %7 = tpu.matmul %5, %6, %cst {dimension_numbers = #tpu.dot_dimension_numbers<[1], [0], [0], [1], [0, 0, 1, 1], [], []>} : vector<16x128xbf16>, vector<128x128xbf16>, vector<16x128xf32> -> vector<16x128xf32>
    %c0_6 = arith.constant 0 : index
    %c0_7 = arith.constant 0 : index
    %8 = vector.load %arg4[%c0_6, %c0_7] : memref<1x128xf32, #tpu.memory_space<vmem>>, vector<1x128xf32>
    %9 = vector.broadcast %8 : vector<1x128xf32> to vector<16x128xf32>
    %10 = arith.addf %7, %9 : vector<16x128xf32>
    %c0_8 = arith.constant 0 : index
    %c0_9 = arith.constant 0 : index
    %11 = vector.load %arg5[%c0_8, %c0_9] : memref<128x128xbf16, #tpu.memory_space<vmem>>, vector<128x128xbf16>
    %cst_10 = arith.constant dense<0.000000e+00> : vector<16x128xf32>
    %12 = tpu.matmul %5, %11, %cst_10 {dimension_numbers = #tpu.dot_dimension_numbers<[1], [0], [0], [1], [0, 0, 1, 1], [], []>} : vector<16x128xbf16>, vector<128x128xbf16>, vector<16x128xf32> -> vector<16x128xf32>
    %c0_11 = arith.constant 0 : index
    %c0_12 = arith.constant 0 : index
    %13 = vector.load %arg6[%c0_11, %c0_12] : memref<1x128xf32, #tpu.memory_space<vmem>>, vector<1x128xf32>
    %14 = vector.broadcast %13 : vector<1x128xf32> to vector<16x128xf32>
    %15 = arith.addf %12, %14 : vector<16x128xf32>
    %cst_13 = arith.constant 5.000000e-01 : f32
    %16 = vector.broadcast %cst_13 : f32 to vector<16x128xf32>
    %17 = arith.mulf %15, %16 : vector<16x128xf32>
    %cst_14 = arith.constant 0.707106769 : f32
    %18 = vector.broadcast %cst_14 : f32 to vector<16x128xf32>
    %19 = arith.mulf %15, %18 : vector<16x128xf32>
    %cst_15 = arith.constant -3.8325069 : f32
    %cst_16 = arith.constant 3.8325069 : f32
    %20 = vector.broadcast %cst_15 : f32 to vector<16x128xf32>
    %21 = arith.maximumf %20, %19 : vector<16x128xf32>
    %22 = vector.broadcast %cst_16 : f32 to vector<16x128xf32>
    %23 = arith.minimumf %22, %21 : vector<16x128xf32>
    %24 = arith.mulf %23, %23 : vector<16x128xf32>
    %cst_17 = arith.constant 2.29050653E-4 : f32
    %25 = vector.broadcast %cst_17 : f32 to vector<16x128xf32>
    %26 = arith.mulf %25, %24 : vector<16x128xf32>
    %cst_18 = arith.constant 0.00340829091 : f32
    %27 = vector.broadcast %cst_18 : f32 to vector<16x128xf32>
    %28 = arith.addf %26, %27 : vector<16x128xf32>
    %29 = arith.mulf %28, %24 : vector<16x128xf32>
    %cst_19 = arith.constant 0.0509556942 : f32
    %30 = vector.broadcast %cst_19 : f32 to vector<16x128xf32>
    %31 = arith.addf %29, %30 : vector<16x128xf32>
    %32 = arith.mulf %31, %24 : vector<16x128xf32>
    %cst_20 = arith.constant 0.185208321 : f32
    %33 = vector.broadcast %cst_20 : f32 to vector<16x128xf32>
    %34 = arith.addf %32, %33 : vector<16x128xf32>
    %35 = arith.mulf %34, %24 : vector<16x128xf32>
    %cst_21 = arith.constant 1.12837911 : f32
    %36 = vector.broadcast %cst_21 : f32 to vector<16x128xf32>
    %37 = arith.addf %35, %36 : vector<16x128xf32>
    %cst_22 = arith.constant -1.17916031E-7 : f32
    %38 = vector.broadcast %cst_22 : f32 to vector<16x128xf32>
    %39 = arith.mulf %38, %24 : vector<16x128xf32>
    %cst_23 = arith.constant 2.35479656E-5 : f32
    %40 = vector.broadcast %cst_23 : f32 to vector<16x128xf32>
    %41 = arith.addf %39, %40 : vector<16x128xf32>
    %42 = arith.mulf %41, %24 : vector<16x128xf32>
    %cst_24 = arith.constant 0.00101796258 : f32
    %43 = vector.broadcast %cst_24 : f32 to vector<16x128xf32>
    %44 = arith.addf %42, %43 : vector<16x128xf32>
    %45 = arith.mulf %44, %24 : vector<16x128xf32>
    %cst_25 = arith.constant 0.0140704699 : f32
    %46 = vector.broadcast %cst_25 : f32 to vector<16x128xf32>
    %47 = arith.addf %45, %46 : vector<16x128xf32>
    %48 = arith.mulf %47, %24 : vector<16x128xf32>
    %cst_26 = arith.constant 0.110985048 : f32
    %49 = vector.broadcast %cst_26 : f32 to vector<16x128xf32>
    %50 = arith.addf %48, %49 : vector<16x128xf32>
    %51 = arith.mulf %50, %24 : vector<16x128xf32>
    %cst_27 = arith.constant 0.497469246 : f32
    %52 = vector.broadcast %cst_27 : f32 to vector<16x128xf32>
    %53 = arith.addf %51, %52 : vector<16x128xf32>
    %54 = arith.mulf %53, %24 : vector<16x128xf32>
    %cst_28 = arith.constant 1.000000e+00 : f32
    %55 = vector.broadcast %cst_28 : f32 to vector<16x128xf32>
    %56 = arith.addf %54, %55 : vector<16x128xf32>
    %57 = arith.mulf %23, %37 : vector<16x128xf32>
    %58 = arith.divf %57, %56 : vector<16x128xf32>
    %cst_29 = arith.constant 1.000000e+00 : f32
    %59 = vector.broadcast %cst_29 : f32 to vector<16x128xf32>
    %60 = arith.addf %59, %58 : vector<16x128xf32>
    %61 = arith.mulf %17, %60 : vector<16x128xf32>
    %62 = arith.mulf %10, %61 : vector<16x128xf32>
    %63 = arith.truncf %62 : vector<16x128xf32> to vector<16x128xbf16>
    %c0_30 = arith.constant 0 : index
    %c0_31 = arith.constant 0 : index
    %64 = vector.load %arg7[%c0_30, %c0_31] : memref<128x128xbf16, #tpu.memory_space<vmem>>, vector<128x128xbf16>
    %cst_32 = arith.constant dense<0.000000e+00> : vector<16x128xf32>
    %65 = tpu.matmul %63, %64, %cst_32 {dimension_numbers = #tpu.dot_dimension_numbers<[1], [0], [0], [1], [0, 0, 1, 1], [], []>} : vector<16x128xbf16>, vector<128x128xbf16>, vector<16x128xf32> -> vector<16x128xf32>
    %66 = arith.addf %3, %65 : vector<16x128xf32>
    %c0_33 = arith.constant 0 : index
    %c0_34 = arith.constant 0 : index
    %67 = vector.load %arg9[%c0_33, %c0_34] : memref<16x128xf32, #tpu.memory_space<vmem>>, vector<16x128xf32>
    tpu.vector_store %arg9[%c0_33, %c0_34], %66 {strides = array<i32>} : memref<16x128xf32, #tpu.memory_space<vmem>>, vector<16x128xf32>,
    %c0_i32_35 = arith.constant 0 : i32
    %68 = arith.cmpi eq, %arg1, %c0_i32_35 : i32
    %69 = arith.extui %68 : i1 to i32
    %c0_i32_36 = arith.constant 0 : i32
    %70 = arith.cmpi ne, %69, %c0_i32_36 : i32
    scf.if %70 {
      %c0_37 = arith.constant 0 : index
      %c0_38 = arith.constant 0 : index
      %71 = vector.load %arg9[%c0_37, %c0_38] : memref<16x128xf32, #tpu.memory_space<vmem>>, vector<16x128xf32>
      %c0_39 = arith.constant 0 : index
      %c0_40 = arith.constant 0 : index
      %72 = vector.load %arg8[%c0_39, %c0_40] : memref<1x128xf32, #tpu.memory_space<vmem>>, vector<1x128xf32>
      %73 = vector.broadcast %72 : vector<1x128xf32> to vector<16x128xf32>
      %74 = arith.addf %71, %73 : vector<16x128xf32>
      %c0_41 = arith.constant 0 : index
      %c0_42 = arith.constant 0 : index
      %75 = vector.load %arg9[%c0_41, %c0_42] : memref<16x128xf32, #tpu.memory_space<vmem>>, vector<16x128xf32>
      tpu.vector_store %arg9[%c0_41, %c0_42], %74 {strides = array<i32>} : memref<16x128xf32, #tpu.memory_space<vmem>>, vector<16x128xf32>,
    } else {
    }
    return
  }
  func.func @transform_0(%arg0: i32, %arg1: i32) -> (i32, i32) {
    %c0_i32 = arith.constant 0 : i32
    %c0_i32_0 = arith.constant 0 : i32
    return %arg0, %c0_i32 : i32, i32
  }
  func.func @transform_1(%arg0: i32, %arg1: i32) -> (i32, i32) {
    %c0_i32 = arith.constant 0 : i32
    %c0_i32_0 = arith.constant 0 : i32
    return %c0_i32, %arg1 : i32, i32
  }
  func.func @transform_2(%arg0: i32, %arg1: i32) -> (i32, i32) {
    %c0_i32 = arith.constant 0 : i32
    %c0_i32_0 = arith.constant 0 : i32
    return %c0_i32, %arg1 : i32, i32
  }
  func.func @transform_3(%arg0: i32, %arg1: i32) -> (i32, i32) {
    %c0_i32 = arith.constant 0 : i32
    %c0_i32_0 = arith.constant 0 : i32
    return %c0_i32, %arg1 : i32, i32
  }
  func.func @transform_4(%arg0: i32, %arg1: i32) -> (i32, i32) {
    %c0_i32 = arith.constant 0 : i32
    %c0_i32_0 = arith.constant 0 : i32
    return %c0_i32, %arg1 : i32, i32
  }
  func.func @transform_5(%arg0: i32, %arg1: i32) -> (i32, i32) {
    %c0_i32 = arith.constant 0 : i32
    %c0_i32_0 = arith.constant 0 : i32
    return %arg1, %c0_i32 : i32, i32
  }
  func.func @transform_6(%arg0: i32, %arg1: i32) -> (i32, i32) {
    %c0_i32 = arith.constant 0 : i32
    %c0_i32_0 = arith.constant 0 : i32
    %c0_i32_1 = arith.constant 0 : i32
    return %c0_i32, %c0_i32_0 : i32, i32
  }
  func.func @transform_7(%arg0: i32, %arg1: i32) -> (i32, i32) {
    %c0_i32 = arith.constant 0 : i32
    %c0_i32_0 = arith.constant 0 : i32
    return %arg0, %c0_i32 : i32, i32
  }
}

</mosaic_0001>

<llo_original>
// kernel: tpu_custom_call.1
$region0: #{tpu_custom_call.1}
  #allocation0 [shape = 'u32[]', space=smem, size = 0x4, offset = 0x4, fixed_abs, tag = 'smem constant byte address 0x4 - core index']
  #allocation1 [shape = 'u32[72,128]{1,0:T(1,128)}', space=vmem, size = 0x9000, scoped, tag = 'internal scratch']
  %s0 = inlined_call_operand.hbm [shape: f32[16,128], index: 0, kind: input, shape index: {}]
  %s1 = inlined_call_operand.hbm [shape: bf16[128,128], index: 1, kind: input, shape index: {}]
  %s2 = inlined_call_operand.vmem [shape: f32[1,128], index: 2, kind: input, shape index: {}]
  %s3 = inlined_call_operand.hbm [shape: bf16[128,128], index: 3, kind: input, shape index: {}]
  %s4 = inlined_call_operand.vmem [shape: f32[1,128], index: 4, kind: input, shape index: {}]
  %s5 = inlined_call_operand.hbm [shape: bf16[128,128], index: 5, kind: input, shape index: {}]
  %s6 = inlined_call_operand.vmem [shape: f32[1,128], index: 6, kind: input, shape index: {}]
  %s7 = inlined_call_operand.hbm [shape: f32[16,128], index: 7, kind: output, shape index: {}]
  %s8 = sld [smem:[#allocation0]]
  $region62: #{tpu_custom_call.1} parent=0
    _
  %s10 = ssub.s32 1, %s8
  %s11 = scalar_select 0, %s10, %s8
  $region1: #{tpu_custom_call.1} parent=0
    #allocation2 [shape = 'u8[8192]{0}', space=vmem, size = 0x2000, scoped, tag = 'input window, operand 0, single buffered']
    #allocation3 [shape = 's32[1]{0}', space=sflag, size = 0x4, scoped, tag = 'scoped memory for tpu_custom_call.1']
    #allocation4 [shape = 's32[1]{0}', space=sflag, size = 0x4, scoped, tag = 'scoped memory for tpu_custom_call.1']
    #allocation5 [shape = 'u8[32768]{0}', space=vmem, size = 0x8000, scoped, tag = 'input window, operand 1, single buffered']
    #allocation6 [shape = 's32[1]{0}', space=sflag, size = 0x4, scoped, tag = 'scoped memory for tpu_custom_call.1']
    #allocation7 [shape = 'u8[32768]{0}', space=vmem, size = 0x8000, scoped, tag = 'input window, operand 3, single buffered']
    #allocation8 [shape = 'u8[32768]{0}', space=vmem, size = 0x8000, scoped, tag = 'input window, operand 5, single buffered']
    #allocation9 [shape = 's32[1]{0}', space=sflag, size = 0x4, scoped, tag = 'scoped memory for tpu_custom_call.1']
    #allocation10 [shape = 'u8[8192]{0}', space=vmem, size = 0x2000, scoped, tag = 'output window, operand 0, single buffered']
    %12 = vsyncpa [#allocation3], 0
    %13 = vsyncpa [#allocation6], 0
    %14 = vsyncpa [#allocation9], 0
    %15 = vsyncpa [#allocation4], 0
    // Predicated region
    $region2: #{tpu_custom_call.1} parent=1 // pred_check
      _
    $region3: #{tpu_custom_call.1} parent=1 // pred_check_branch
      %17 = sbr.rel (0) target = $region5
    $region4: #{tpu_custom_call.1} parent=1 // pred_region
      %19 = vsyncadd [#allocation3], 0
      %s20 = sshll.u32 %s0, 4
      %s21 = int_to_ptr.hbm [resolvable:$true] %s20
      %s22 = sshll.u32 [#allocation2], 4
      %s23 = int_to_ptr.vmem [resolvable:$true] %s22
      %28 = dma.hbm_to_vmem [thread:$0]  %s21, 256, %s23, [#allocation3], 128, 128, 8
    $region5: #{tpu_custom_call.1} parent=1 // pred_fallthru
      _
    // Predicated region
    $region6: #{tpu_custom_call.1} parent=1 // pred_check
      _
    $region7: #{tpu_custom_call.1} parent=1 // pred_check_branch
      %30 = sbr.rel (0) target = $region9
    $region8: #{tpu_custom_call.1} parent=1 // pred_region
      %32 = vsyncadd [#allocation6], 0
      %s33 = sshll.u32 %s1, 4
      %s34 = int_to_ptr.hbm [resolvable:$true] %s33
      %s35 = sshll.u32 [#allocation5], 4
      %s36 = int_to_ptr.vmem [resolvable:$true] %s35
      %41 = dma.hbm_to_vmem [thread:$0]  %s34, 1024, %s36, [#allocation6], 64, 64, 4
    $region9: #{tpu_custom_call.1} parent=1 // pred_fallthru
      _
    // Predicated region
    $region10: #{tpu_custom_call.1} parent=1 // pred_check
      _
    $region11: #{tpu_custom_call.1} parent=1 // pred_check_branch
      %43 = sbr.rel (0) target = $region13
    $region12: #{tpu_custom_call.1} parent=1 // pred_region
      _
    $region13: #{tpu_custom_call.1} parent=1 // pred_fallthru
      _
    // Predicated region
    $region14: #{tpu_custom_call.1} parent=1 // pred_check
      _
    $region15: #{tpu_custom_call.1} parent=1 // pred_check_branch
      %45 = sbr.rel (0) target = $region17
    $region16: #{tpu_custom_call.1} parent=1 // pred_region
      %47 = vsyncadd [#allocation6], 0
      %s48 = sshll.u32 %s3, 4
      %s49 = int_to_ptr.hbm [resolvable:$true] %s48
      %s50 = sshll.u32 [#allocation7], 4
      %s51 = int_to_ptr.vmem [resolvable:$true] %s50
      %56 = dma.hbm_to_vmem [thread:$0]  %s49, 1024, %s51, [#allocation6], 64, 64, 4
    $region17: #{tpu_custom_call.1} parent=1 // pred_fallthru
      _
    // Predicated region
    $region18: #{tpu_custom_call.1} parent=1 // pred_check
      _
    $region19: #{tpu_custom_call.1} parent=1 // pred_check_branch
      %58 = sbr.rel (0) target = $region21
    $region20: #{tpu_custom_call.1} parent=1 // pred_region
      _
    $region21: #{tpu_custom_call.1} parent=1 // pred_fallthru
      _
    // Predicated region
    $region22: #{tpu_custom_call.1} parent=1 // pred_check
      _
    $region23: #{tpu_custom_call.1} parent=1 // pred_check_branch
      %60 = sbr.rel (0) target = $region25
    $region24: #{tpu_custom_call.1} parent=1 // pred_region
      %62 = vsyncadd [#allocation9], 0
      %s63 = sshll.u32 %s5, 4
      %s64 = int_to_ptr.hbm [resolvable:$true] %s63
      %s65 = sshll.u32 [#allocation8], 4
      %s66 = int_to_ptr.vmem [resolvable:$true] %s65
      %71 = dma.hbm_to_vmem [thread:$0]  %s64, 1024, %s66, [#allocation9], 64, 64, 4
    $region25: #{tpu_custom_call.1} parent=1 // pred_fallthru
      _
    // Predicated region
    $region26: #{tpu_custom_call.1} parent=1 // pred_check
      _
    $region27: #{tpu_custom_call.1} parent=1 // pred_check_branch
      %73 = sbr.rel (0) target = $region29
    $region28: #{tpu_custom_call.1} parent=1 // pred_region
      _
    $region29: #{tpu_custom_call.1} parent=1 // pred_fallthru
      _
    // Predicated region
    $region30: #{tpu_custom_call.1} parent=1 // pred_check
      _
    $region31: #{tpu_custom_call.1} parent=1 // pred_check_branch
      %75 = sbr.rel (0) target = $region33
    $region32: #{tpu_custom_call.1} parent=1 // pred_region
      %77 = dma.done [#allocation3], 256
    $region33: #{tpu_custom_call.1} parent=1 // pred_fallthru
      _
    // Predicated region
    $region34: #{tpu_custom_call.1} parent=1 // pred_check
      _
    $region35: #{tpu_custom_call.1} parent=1 // pred_check_branch
      %79 = sbr.rel (0) target = $region37
    $region36: #{tpu_custom_call.1} parent=1 // pred_region
      %81 = dma.done [#allocation6], 1024
    $region37: #{tpu_custom_call.1} parent=1 // pred_fallthru
      _
    // Predicated region
    $region38: #{tpu_custom_call.1} parent=1 // pred_check
      _
    $region39: #{tpu_custom_call.1} parent=1 // pred_check_branch
      %83 = sbr.rel (0) target = $region41
    $region40: #{tpu_custom_call.1} parent=1 // pred_region
      %85 = dma.done [#allocation6], 1024
    $region41: #{tpu_custom_call.1} parent=1 // pred_fallthru
      _
    // Predicated region
    $region42: #{tpu_custom_call.1} parent=1 // pred_check
      _
    $region43: #{tpu_custom_call.1} parent=1 // pred_check_branch
      %87 = sbr.rel (0) target = $region45
    $region44: #{tpu_custom_call.1} parent=1 // pred_region
      %89 = dma.done [#allocation9], 1024
    $region45: #{tpu_custom_call.1} parent=1 // pred_fallthru
      _
    %p90 = scmp.eq.s32.totalorder 0, 0
    // Predicated region
    $region46: #{tpu_custom_call.1} parent=1 // pred_check
      %p91 = pneg %p90
    $region47: #{tpu_custom_call.1} parent=1 // pred_check_branch
      %93 = sbr.rel (%p91) target = $region49
    $region48: #{tpu_custom_call.1} parent=1 // pred_region
      %94 = vst [vmem:[#allocation10] sm:$0xff] 0.0
      %95 = vst [vmem:[#allocation10 + $0x8] sm:$0xff] 0.0
    $region49: #{tpu_custom_call.1} parent=1 // pred_fallthru
      _
    %v96 = vld [vmem:[#allocation10] sm:$0xff]
    %v97 = vld [vmem:[#allocation10 + $0x8] sm:$0xff]
    %v98 = vld [vmem:[#allocation2] sm:$0xff]
    %v99 = vld [vmem:[#allocation2 + $0x8] sm:$0xff]
    %v100 = vpack.c.bf16 %v99, %v98
    %v101 = vld [vmem:[#allocation5] sm:$0xf]
    %v102 = vld [vmem:[#allocation5 + $0x4] sm:$0xf]
    %v103 = vld [vmem:[#allocation5 + $0x8] sm:$0xf]
    %v104 = vld [vmem:[#allocation5 + $0xc] sm:$0xf]
    %v105 = vld [vmem:[#allocation5 + $0x10] sm:$0xf]
    %v106 = vld [vmem:[#allocation5 + $0x14] sm:$0xf]
    %v107 = vld [vmem:[#allocation5 + $0x18] sm:$0xf]
    %v108 = vld [vmem:[#allocation5 + $0x1c] sm:$0xf]
    %v109 = vld [vmem:[#allocation5 + $0x20] sm:$0xf]
    %v110 = vld [vmem:[#allocation5 + $0x24] sm:$0xf]
    %v111 = vld [vmem:[#allocation5 + $0x28] sm:$0xf]
    %v112 = vld [vmem:[#allocation5 + $0x2c] sm:$0xf]
    %v113 = vld [vmem:[#allocation5 + $0x30] sm:$0xf]
    %v114 = vld [vmem:[#allocation5 + $0x34] sm:$0xf]
    %v115 = vld [vmem:[#allocation5 + $0x38] sm:$0xf]
    %v116 = vld [vmem:[#allocation5 + $0x3c] sm:$0xf]
    %v117 = vld [vmem:[%s2] sm:$0x1]
    %v119 = vperm.slane %v117, 0
    %v137 = vunpack.c.l.b16 %v101
    %v138 = vunpack.c.l.b16 %v102
    %v139 = vunpack.c.l.b16 %v103
    %v140 = vunpack.c.l.b16 %v104
    %v141 = vunpack.c.l.b16 %v105
    %v142 = vunpack.c.l.b16 %v106
    %v143 = vunpack.c.l.b16 %v107
    %v144 = vunpack.c.l.b16 %v108
    %v145 = vunpack.c.l.b16 %v109
    %v146 = vunpack.c.l.b16 %v110
    %v147 = vunpack.c.l.b16 %v111
    %v148 = vunpack.c.l.b16 %v112
    %v149 = vunpack.c.l.b16 %v113
    %v150 = vunpack.c.l.b16 %v114
    %v151 = vunpack.c.l.b16 %v115
    %v152 = vunpack.c.l.b16 %v116
    %v153 = vpack.c.b16 %v138, %v137
    %v154 = vpack.c.b16 %v140, %v139
    %v155 = vpack.c.b16 %v142, %v141
    %v156 = vpack.c.b16 %v144, %v143
    %v157 = vpack.c.b16 %v146, %v145
    %v158 = vpack.c.b16 %v148, %v147
    %v159 = vpack.c.b16 %v150, %v149
    %v160 = vpack.c.b16 %v152, %v151
    %169 = vmatpush.bf16.msra.mxu0 %v160
    %170 = vmatpush.bf16.msra.mxu0 %v159
    %171 = vmatpush.bf16.msra.mxu0 %v158
    %172 = vmatpush.bf16.msra.mxu0 %v157
    %173 = vmatpush.bf16.msra.mxu0 %v156
    %174 = vmatpush.bf16.msra.mxu0 %v155
    %175 = vmatpush.bf16.msra.mxu0 %v154
    %176 = vmatpush.bf16.msra.mxu0 %v153
    %177 = vmatmul.bf16.gmra.mxu0 %v100
    %v178 = vpop.f32.mrf.mxu0
    %v179 = vadd.f32 %v119, %v178
    %v180 = vpop.f32.mrf.mxu0
    %v181 = vadd.f32 %v119, %v180
    %182 = vdwg.mxu0
    %v183 = vld [vmem:[#allocation7] sm:$0xf]
    %v184 = vld [vmem:[#allocation7 + $0x4] sm:$0xf]
    %v185 = vld [vmem:[#allocation7 + $0x8] sm:$0xf]
    %v186 = vld [vmem:[#allocation7 + $0xc] sm:$0xf]
    %v187 = vld [vmem:[#allocation7 + $0x10] sm:$0xf]
    %v188 = vld [vmem:[#allocation7 + $0x14] sm:$0xf]
    %v189 = vld [vmem:[#allocation7 + $0x18] sm:$0xf]
    %v190 = vld [vmem:[#allocation7 + $0x1c] sm:$0xf]
    %v191 = vld [vmem:[#allocation7 + $0x20] sm:$0xf]
    %v192 = vld [vmem:[#allocation7 + $0x24] sm:$0xf]
    %v193 = vld [vmem:[#allocation7 + $0x28] sm:$0xf]
    %v194 = vld [vmem:[#allocation7 + $0x2c] sm:$0xf]
    %v195 = vld [vmem:[#allocation7 + $0x30] sm:$0xf]
    %v196 = vld [vmem:[#allocation7 + $0x34] sm:$0xf]
    %v197 = vld [vmem:[#allocation7 + $0x38] sm:$0xf]
    %v198 = vld [vmem:[#allocation7 + $0x3c] sm:$0xf]
    %v199 = vld [vmem:[%s4] sm:$0x1]
    %v201 = vperm.slane %v199, 0
    %v219 = vunpack.c.l.b16 %v183
    %v220 = vunpack.c.l.b16 %v184
    %v221 = vunpack.c.l.b16 %v185
    %v222 = vunpack.c.l.b16 %v186
    %v223 = vunpack.c.l.b16 %v187
    %v224 = vunpack.c.l.b16 %v188
    %v225 = vunpack.c.l.b16 %v189
    %v226 = vunpack.c.l.b16 %v190
    %v227 = vunpack.c.l.b16 %v191
    %v228 = vunpack.c.l.b16 %v192
    %v229 = vunpack.c.l.b16 %v193
    %v230 = vunpack.c.l.b16 %v194
    %v231 = vunpack.c.l.b16 %v195
    %v232 = vunpack.c.l.b16 %v196
    %v233 = vunpack.c.l.b16 %v197
    %v234 = vunpack.c.l.b16 %v198
    %v235 = vpack.c.b16 %v220, %v219
    %v236 = vpack.c.b16 %v222, %v221
    %v237 = vpack.c.b16 %v224, %v223
    %v238 = vpack.c.b16 %v226, %v225
    %v239 = vpack.c.b16 %v228, %v227
    %v240 = vpack.c.b16 %v230, %v229
    %v241 = vpack.c.b16 %v232, %v231
    %v242 = vpack.c.b16 %v234, %v233
    %251 = vmatpush.bf16.msra.mxu0 %v242
    %252 = vmatpush.bf16.msra.mxu0 %v241
    %253 = vmatpush.bf16.msra.mxu0 %v240
    %254 = vmatpush.bf16.msra.mxu0 %v239
    %255 = vmatpush.bf16.msra.mxu0 %v238
    %256 = vmatpush.bf16.msra.mxu0 %v237
    %257 = vmatpush.bf16.msra.mxu0 %v236
    %258 = vmatpush.bf16.msra.mxu0 %v235
    %259 = vmatmul.bf16.gmra.mxu0 %v100
    %v260 = vpop.f32.mrf.mxu0
    %v261 = vadd.f32 %v201, %v260
    %v262 = vpop.f32.mrf.mxu0
    %v263 = vadd.f32 %v201, %v262
    %264 = vdwg.mxu0
    %v265 = vmul.f32 %v261, 0.5
    %v266 = vmul.f32 %v263, 0.5
    %v267 = vmul.f32 %v261, 0.70710677
    %v268 = vmul.f32 %v263, 0.70710677
    %v269 = vmax.f32 %v267, -3.832507
    %v270 = vmax.f32 %v268, -3.832507
    %v271 = vmin.f32 %v269, 3.832507
    %v272 = vmin.f32 %v270, 3.832507
    %v273 = vmul.f32 %v271, %v271
    %v274 = vmul.f32 %v272, %v272
    %v275 = vmul.f32 %v273, 0.00022905065
    %v276 = vmul.f32 %v274, 0.00022905065
    %v277 = vadd.f32 %v275, 0.003408291
    %v278 = vadd.f32 %v276, 0.003408291
    %v279 = vmul.f32 %v277, %v273
    %v280 = vmul.f32 %v278, %v274
    %v281 = vadd.f32 %v279, 0.050955694
    %v282 = vadd.f32 %v280, 0.050955694
    %v283 = vmul.f32 %v281, %v273
    %v284 = vmul.f32 %v282, %v274
    %v285 = vadd.f32 %v283, 0.18520832
    %v286 = vadd.f32 %v284, 0.18520832
    %v287 = vmul.f32 %v285, %v273
    %v288 = vmul.f32 %v286, %v274
    %v289 = vadd.f32 %v287, 1.1283791
    %v290 = vadd.f32 %v288, 1.1283791
    %v291 = vmul.f32 %v273, -1.1791603e-07
    %v292 = vmul.f32 %v274, -1.1791603e-07
    %v293 = vadd.f32 %v291, 2.3547966e-05
    %v294 = vadd.f32 %v292, 2.3547966e-05
    %v295 = vmul.f32 %v293, %v273
    %v296 = vmul.f32 %v294, %v274
    %v297 = vadd.f32 %v295, 0.0010179626
    %v298 = vadd.f32 %v296, 0.0010179626
    %v299 = vmul.f32 %v297, %v273
    %v300 = vmul.f32 %v298, %v274
    %v301 = vadd.f32 %v299, 0.01407047
    %v302 = vadd.f32 %v300, 0.01407047
    %v303 = vmul.f32 %v301, %v273
    %v304 = vmul.f32 %v302, %v274
    %v305 = vadd.f32 %v303, 0.11098505
    %v306 = vadd.f32 %v304, 0.11098505
    %v307 = vmul.f32 %v305, %v273
    %v308 = vmul.f32 %v306, %v274
    %v309 = vadd.f32 %v307, 0.49746925
    %v310 = vadd.f32 %v308, 0.49746925
    %v311 = vmul.f32 %v309, %v273
    %v312 = vmul.f32 %v310, %v274
    %v313 = vadd.f32 %v311, 1.0
    %v314 = vadd.f32 %v312, 1.0
    %v315 = vmul.f32 %v271, %v289
    %v316 = vmul.f32 %v272, %v290
    %v317 = vrcp.pop %v313
    %v318 = vmul.f32 %v313, %v317
    %v319 = vsub.f32 1.0, %v318
    %v320 = vmul.f32 %v317, %v319
    %v321 = vadd.f32 %v317, %v320
    %vm322 = vweird.f32 %v313
    %vm323 = vweird.f32 %v317
    %vm324 = vmor %vm322, %vm323
    %v325 = vsel %vm324, %v317, %v321
    %v326 = vand.u32 2147483647, %v313
    %vm327 = vcmp.eq.f32.partialorder %v326, 8.507059e+37
    %v328 = vand.u32 %v313, 2147483648
    %v329 = vor.u32 1.1754944e-38, %v328
    %v330 = vsel %vm327, %v329, %v325
    %v331 = vmul.f32 %v315, %v330
    %v332 = vrcp.pop %v314
    %v333 = vmul.f32 %v314, %v332
    %v334 = vsub.f32 1.0, %v333
    %v335 = vmul.f32 %v332, %v334
    %v336 = vadd.f32 %v332, %v335
    %vm337 = vweird.f32 %v314
    %vm338 = vweird.f32 %v332
    %vm339 = vmor %vm337, %vm338
    %v340 = vsel %vm339, %v332, %v336
    %v341 = vand.u32 2147483647, %v314
    %vm342 = vcmp.eq.f32.partialorder %v341, 8.507059e+37
    %v343 = vand.u32 %v314, 2147483648
    %v344 = vor.u32 1.1754944e-38, %v343
    %v345 = vsel %vm342, %v344, %v340
    %v346 = vmul.f32 %v316, %v345
    %v347 = vadd.f32 %v331, 1.0
    %v348 = vadd.f32 %v346, 1.0
    %v349 = vmul.f32 %v265, %v347
    %v350 = vmul.f32 %v266, %v348
    %v351 = vmul.f32 %v179, %v349
    %v352 = vmul.f32 %v181, %v350
    %v353 = vpack.c.bf16 %v352, %v351
    %v354 = vld [vmem:[#allocation8] sm:$0xf]
    %v355 = vld [vmem:[#allocation8 + $0x4] sm:$0xf]
    %v356 = vld [vmem:[#allocation8 + $0x8] sm:$0xf]
    %v357 = vld [vmem:[#allocation8 + $0xc] sm:$0xf]
    %v358 = vld [vmem:[#allocation8 + $0x10] sm:$0xf]
    %v359 = vld [vmem:[#allocation8 + $0x14] sm:$0xf]
    %v360 = vld [vmem:[#allocation8 + $0x18] sm:$0xf]
    %v361 = vld [vmem:[#allocation8 + $0x1c] sm:$0xf]
    %v362 = vld [vmem:[#allocation8 + $0x20] sm:$0xf]
    %v363 = vld [vmem:[#allocation8 + $0x24] sm:$0xf]
    %v364 = vld [vmem:[#allocation8 + $0x28] sm:$0xf]
    %v365 = vld [vmem:[#allocation8 + $0x2c] sm:$0xf]
    %v366 = vld [vmem:[#allocation8 + $0x30] sm:$0xf]
    %v367 = vld [vmem:[#allocation8 + $0x34] sm:$0xf]
    %v368 = vld [vmem:[#allocation8 + $0x38] sm:$0xf]
    %v369 = vld [vmem:[#allocation8 + $0x3c] sm:$0xf]
    %v386 = vunpack.c.l.b16 %v354
    %v387 = vunpack.c.l.b16 %v355
    %v388 = vunpack.c.l.b16 %v356
    %v389 = vunpack.c.l.b16 %v357
    %v390 = vunpack.c.l.b16 %v358
    %v391 = vunpack.c.l.b16 %v359
    %v392 = vunpack.c.l.b16 %v360
    %v393 = vunpack.c.l.b16 %v361
    %v394 = vunpack.c.l.b16 %v362
    %v395 = vunpack.c.l.b16 %v363
    %v396 = vunpack.c.l.b16 %v364
    %v397 = vunpack.c.l.b16 %v365
    %v398 = vunpack.c.l.b16 %v366
    %v399 = vunpack.c.l.b16 %v367
    %v400 = vunpack.c.l.b16 %v368
    %v401 = vunpack.c.l.b16 %v369
    %v402 = vpack.c.b16 %v387, %v386
    %v403 = vpack.c.b16 %v389, %v388
    %v404 = vpack.c.b16 %v391, %v390
    %v405 = vpack.c.b16 %v393, %v392
    %v406 = vpack.c.b16 %v395, %v394
    %v407 = vpack.c.b16 %v397, %v396
    %v408 = vpack.c.b16 %v399, %v398
    %v409 = vpack.c.b16 %v401, %v400
    %418 = vmatpush.bf16.msra.mxu0 %v409
    %419 = vmatpush.bf16.msra.mxu0 %v408
    %420 = vmatpush.bf16.msra.mxu0 %v407
    %421 = vmatpush.bf16.msra.mxu0 %v406
    %422 = vmatpush.bf16.msra.mxu0 %v405
    %423 = vmatpush.bf16.msra.mxu0 %v404
    %424 = vmatpush.bf16.msra.mxu0 %v403
    %425 = vmatpush.bf16.msra.mxu0 %v402
    %426 = vmatmul.bf16.gmra.mxu0 %v353
    %v427 = vpop.f32.mrf.mxu0
    %v428 = vadd.f32 0.0, %v427
    %v429 = vpop.f32.mrf.mxu0
    %v430 = vadd.f32 0.0, %v429
    %431 = vdwg.mxu0
    %v432 = vadd.f32 %v96, %v428
    %v433 = vadd.f32 %v97, %v430
    %434 = vst [vmem:[#allocation10] sm:$0xff] %v432
    %435 = vst [vmem:[#allocation10 + $0x8] sm:$0xff] %v433
    // Predicated region
    $region50: #{tpu_custom_call.1} parent=1 // pred_check
      %p436 = pneg %p90
    $region51: #{tpu_custom_call.1} parent=1 // pred_check_branch
      %438 = sbr.rel (%p436) target = $region53
    $region52: #{tpu_custom_call.1} parent=1 // pred_region
      %v439 = vld [vmem:[#allocation10] sm:$0xff]
      %v440 = vld [vmem:[#allocation10 + $0x8] sm:$0xff]
      %v441 = vld [vmem:[%s6] sm:$0x1]
      %v443 = vperm.slane %v441, 0
      %v445 = vadd.f32 %v439, %v443
      %v446 = vadd.f32 %v440, %v443
      %447 = vst [vmem:[#allocation10] sm:$0xff] %v445
      %448 = vst [vmem:[#allocation10 + $0x8] sm:$0xff] %v446
    $region53: #{tpu_custom_call.1} parent=1 // pred_fallthru
      _
    // Predicated region
    $region54: #{tpu_custom_call.1} parent=1 // pred_check
      _
    $region55: #{tpu_custom_call.1} parent=1 // pred_check_branch
      %450 = sbr.rel (0) target = $region57
    $region56: #{tpu_custom_call.1} parent=1 // pred_region
      %452 = vsyncadd [#allocation4], 0
      %s453 = sshll.u32 [#allocation10], 4
      %s454 = int_to_ptr.vmem [resolvable:$true] %s453
      %s455 = sshll.u32 %s7, 4
      %s456 = int_to_ptr.hbm [resolvable:$true] %s455
      %461 = dma.vmem_to_hbm [thread:$0]  %s454, 256, %s456, [#allocation4], 128, 128, 8
    $region57: #{tpu_custom_call.1} parent=1 // pred_fallthru
      _
    // Predicated region
    $region58: #{tpu_custom_call.1} parent=1 // pred_check
      _
    $region59: #{tpu_custom_call.1} parent=1 // pred_check_branch
      %463 = sbr.rel (0) target = $region61
    $region60: #{tpu_custom_call.1} parent=1 // pred_region
      %465 = dma.done [#allocation4], 256
    $region61: #{tpu_custom_call.1} parent=1 // pred_fallthru
      _
    %466 = vsyncpa [#allocation3], 1
    %467 = vsyncpa [#allocation6], 1
    %468 = vsyncpa [#allocation9], 1
    %469 = vsyncpa [#allocation4], 1

</llo_original>
